<compile_context>
chip_gen: v5e
topology: v5e:2x2
jax: 0.10.0
libtpu: 0.0.40
codegen_flags: <defaults>
</compile_context>

<pallas_src>
import functools

import jax
import jax.numpy as jnp
from jax.experimental import pallas as pl
from jax.experimental.pallas import tpu as pltpu


def _transition_kernel(x_ref, w1_ref, w2_ref, c_ref, mu_ref, *, eps, width, d_out):
    # fc: bf16 operands on the MXU, f32 accumulation.  If the caller already
    # supplies bf16 activations there is no conversion pass at all.
    x = x_ref[...]
    if x.dtype != jnp.bfloat16:
        x = x.astype(jnp.bfloat16)
    h = jnp.dot(x, w1_ref[...], preferred_element_type=jnp.float32)

    # Packed constants block (4, P) f32:
    #   row 0 = fc bias, row 1 = LN gamma, row 2 = LN beta, row 3 = fc_mu bias.
    c = c_ref[...]
    h = h + c[0:1, :width]

    # LayerNorm over last dim, in f32 (biased variance, eps inside rsqrt;
    # matches torch.nn.LayerNorm).
    mean = jnp.mean(h, axis=-1, keepdims=True)
    centered = h - mean
    var = jnp.mean(centered * centered, axis=-1, keepdims=True)
    h = centered * jax.lax.rsqrt(var + eps) * c[1:2, :width] + c[2:3, :width]

    # ReLU in f32, then bf16 for the second MXU matmul.
    h = jnp.maximum(h, 0.0).astype(jnp.bfloat16)

    # fc_mu: (tb, W) @ (W, d_out) + bias, f32 accumulation.
    mu = jnp.dot(h, w2_ref[...], preferred_element_type=jnp.float32)
    mu = mu + c[3:4, :d_out]
    # NOTE: d_out < 128 means this store is lane-masked (vst.msk).  A packed
    # (tb, d_out) -> (tb//4, 128) store would be lane-dense but needs an
    # in-kernel relayout crossing (8,128) tiles; at these sizes the relayout
    # costs more than the masked-store slots it saves, so we keep (tb, d_out).
    mu_ref[...] = mu.astype(mu_ref.dtype)


def _round_up(n, m):
    return ((n + m - 1) // m) * m


def deterministic_transition_forward(x, params, *, eps=1e-5, batch_tile=1024):
    """x: [B, encoder_feature_dim + action_dim], f32 or bf16.

    Returns (mu, None) with mu: [B, encoder_feature_dim] float32.
    """
    w1, w2, consts = params["w1"], params["w2"], params["consts"]
    B, d_in = x.shape
    width = int(w1.shape[1])
    d_out = int(w2.shape[1])

    # Batch tile: multiple of 8 sublanes.  Large batches -> big tiles (the
    # kernel is per-grid-step-overhead bound).  When the whole batch fits in
    # one tile, split it in two so the "parallel" axis can feed both v7x
    # TensorCores.
    if B > batch_tile:
        tb = _round_up(batch_tile, 8)
    else:
        tb = max(8, _round_up(pl.cdiv(B, 2), 8))
    grid = (pl.cdiv(B, tb),)

    bytes_accessed = (
        x.size * x.dtype.itemsize
        + sum(int(a.size) * a.dtype.itemsize for a in (w1, w2, consts))
        + B * d_out * 4)
    cost = pl.CostEstimate(
        flops=2 * B * (d_in * width + width * d_out),
        transcendentals=0,
        bytes_accessed=int(bytes_accessed))

    # Weights / packed constants: constant index maps -> VMEM-resident across
    # grid steps (DMA'd once; no re-fetch per batch tile).
    def resident(a):
        return pl.BlockSpec(a.shape, lambda i: (0,) * a.ndim)

    mu = pl.pallas_call(
        functools.partial(_transition_kernel, eps=eps, width=width, d_out=d_out),
        out_shape=jax.ShapeDtypeStruct((B, d_out), jnp.float32),
        grid=grid,
        in_specs=[pl.BlockSpec((tb, d_in), lambda i: (i, 0)),
                  resident(w1), resident(w2), resident(consts)],
        out_specs=pl.BlockSpec((tb, d_out), lambda i: (i, 0)),
        compiler_params=pltpu.CompilerParams(
            dimension_semantics=("parallel",)),
        cost_estimate=cost,
    )(x, w1, w2, consts)

    return mu, None


def init_params(key, encoder_feature_dim, action_dim, layer_width):
    """Deterministic synthetic init (shapes match the nn.Module __init__).

    Weights stored [in, out] in bf16 (halves weight DMA bytes); the four small
    per-feature vectors are packed into one (4, P) f32 array at init time:
      row 0 = fc bias, row 1 = LN gamma, row 2 = LN beta, row 3 = fc_mu bias.
    """
    d_in = encoder_feature_dim + action_dim
    k1, k2, k3, k4 = jax.random.split(key, 4)
    lim1 = 1.0 / jnp.sqrt(d_in)
    lim2 = 1.0 / jnp.sqrt(layer_width)

    w1 = jax.random.uniform(k1, (d_in, layer_width), jnp.float32,
                            -lim1, lim1).astype(jnp.bfloat16)
    b1 = jax.random.uniform(k2, (layer_width,), jnp.float32, -lim1, lim1)
    gamma = jnp.ones((layer_width,), jnp.float32)
    beta = jnp.zeros((layer_width,), jnp.float32)
    w2 = jax.random.uniform(k3, (layer_width, encoder_feature_dim),
                            jnp.float32, -lim2, lim2).astype(jnp.bfloat16)
    b2 = jax.random.uniform(k4, (encoder_feature_dim,), jnp.float32,
                            -lim2, lim2)

    P = max(layer_width, encoder_feature_dim)
    consts = jnp.zeros((4, P), jnp.float32)
    consts = consts.at[0, :layer_width].set(b1)
    consts = consts.at[1, :layer_width].set(gamma)
    consts = consts.at[2, :layer_width].set(beta)
    consts = consts.at[3, :encoder_feature_dim].set(b2)
    return {"w1": w1, "w2": w2, "consts": consts}


def _unpack_params(params):
    w1, w2, c = params["w1"], params["w2"], params["consts"]
    width = w1.shape[1]
    d_out = w2.shape[1]
    return w1, c[0, :width], c[1, :width], c[2, :width], w2, c[3, :d_out]


def _reference_forward_bf16(x, params, eps=1e-5):
    """Pure-JAX reference with the same bf16-matmul / f32-elementwise recipe."""
    w1, b1, gamma, beta, w2, b2 = _unpack_params(params)
    h = jnp.dot(x.astype(jnp.bfloat16), w1,
                preferred_element_type=jnp.float32) + b1
    mean = jnp.mean(h, axis=-1, keepdims=True)
    var = jnp.mean((h - mean) ** 2, axis=-1, keepdims=True)
    h = (h - mean) * jax.lax.rsqrt(var + eps) * gamma + beta
    h = jnp.maximum(h, 0.0).astype(jnp.bfloat16)
    return jnp.dot(h, w2, preferred_element_type=jnp.float32) + b2


def _reference_forward_f32(x, params, eps=1e-5):
    """Pure f32 reference (PyTorch math) — loose sanity check for bf16 weights."""
    w1, b1, gamma, beta, w2, b2 = _unpack_params(params)
    h = x.astype(jnp.float32) @ w1.astype(jnp.float32) + b1
    mean = jnp.mean(h, axis=-1, keepdims=True)
    var = jnp.mean((h - mean) ** 2, axis=-1, keepdims=True)
    h = (h - mean) * jax.lax.rsqrt(var + eps) * gamma + beta
    h = jnp.maximum(h, 0.0)
    return h @ w2.astype(jnp.float32) + b2


if __name__ == "__main__":
    encoder_feature_dim = 32
    action_dim = 4
    layer_width = 32
    d_in = encoder_feature_dim + action_dim

    key = jax.random.PRNGKey(0)
    kx, kp, kx2, kx3 = jax.random.split(key, 4)
    params = init_params(kp, encoder_feature_dim, action_dim, layer_width)

    # Test 1: small batch -> single tile (tb=8, grid=(1,)).
    x = jax.random.normal(kx, (8, d_in), jnp.float32)
    mu, sigma = deterministic_transition_forward(x, params)
    mu = jax.block_until_ready(mu)
    assert sigma is None
    assert mu.shape == (8, encoder_feature_dim)
    assert jnp.allclose(mu, _reference_forward_bf16(x, params),
                        atol=1e-3, rtol=1e-3), "mismatch vs bf16 ref"
    assert jnp.allclose(mu, _reference_forward_f32(x, params),
                        atol=5e-2, rtol=5e-2), "mismatch vs f32 ref"

    # Test 1b: bf16 activations accepted directly (no in-kernel upcast).
    mu_bf, _ = deterministic_transition_forward(x.astype(jnp.bfloat16), params)
    mu_bf = jax.block_until_ready(mu_bf)
    assert jnp.allclose(mu_bf, mu, atol=1e-3, rtol=1e-3), "bf16-input mismatch"

    # Test 2: batch that splits exactly into two tiles (tb=192, grid=(2,)).
    x2 = jax.random.normal(kx2, (384, d_in), jnp.float32)
    mu2, sigma2 = deterministic_transition_forward(x2, params)
    mu2 = jax.block_until_ready(mu2)
    assert sigma2 is None
    assert mu2.shape == (384, encoder_feature_dim)
    assert jnp.allclose(mu2, _reference_forward_bf16(x2, params),
                        atol=1e-3, rtol=1e-3), "two-tile mismatch vs ref"

    # Test 3: ragged batch -> partial last block, no wrapper-side pad/slice
    # (tb=56, grid=(2,), last block masked on store).
    x3 = jax.random.normal(kx3, (100, d_in), jnp.float32)
    mu3, _ = deterministic_transition_forward(x3, params)
    mu3 = jax.block_until_ready(mu3)
    assert mu3.shape == (100, encoder_feature_dim)
    assert jnp.allclose(mu3, _reference_forward_bf16(x3, params),
                        atol=1e-3, rtol=1e-3), "ragged-batch mismatch vs ref"

    print("KERNEL_OK")
</pallas_src>

<mosaic_0001>
module attributes {stable_mosaic.version = 11 : i64} {
  func.func @_transition_kernel(%arg0: i32, %arg1: memref<8x36xf32, #tpu.memory_space<vmem>>, %arg2: memref<36x32xbf16, #tpu.memory_space<vmem>>, %arg3: memref<32x32xbf16, #tpu.memory_space<vmem>>, %arg4: memref<4x32xf32, #tpu.memory_space<vmem>>, %arg5: memref<8x32xf32, #tpu.memory_space<vmem>>) attributes {dimension_semantics = [#tpu.dimension_semantics<parallel>], iteration_bounds = array<i64: 1>, scalar_prefetch = 0 : i64, scratch_operands = 0 : i64, tpu.core_type = #tpu.core_type<tc>, window_params = [{transform_indices = @transform_0, window_bounds = array<i64: 8, 36>}, {pipeline_mode = #tpu.pipeline_mode<synchronous>, transform_indices = @transform_1, window_bounds = array<i64: 36, 32>}, {pipeline_mode = #tpu.pipeline_mode<synchronous>, transform_indices = @transform_2, window_bounds = array<i64: 32, 32>}, {pipeline_mode = #tpu.pipeline_mode<synchronous>, transform_indices = @transform_3, window_bounds = array<i64: 4, 32>}, {transform_indices = @transform_4, window_bounds = array<i64: 8, 32>}]} {
    %c0 = arith.constant 0 : index
    %c0_0 = arith.constant 0 : index
    %0 = vector.load %arg1[%c0, %c0_0] : memref<8x36xf32, #tpu.memory_space<vmem>>, vector<8x36xf32>
    %1 = arith.truncf %0 : vector<8x36xf32> to vector<8x36xbf16>
    %c0_1 = arith.constant 0 : index
    %c0_2 = arith.constant 0 : index
    %2 = vector.load %arg2[%c0_1, %c0_2] : memref<36x32xbf16, #tpu.memory_space<vmem>>, vector<36x32xbf16>
    %cst = arith.constant dense<0.000000e+00> : vector<8x32xf32>
    %3 = tpu.matmul %1, %2, %cst {dimension_numbers = #tpu.dot_dimension_numbers<[1], [0], [0], [1], [0, 0, 1, 1], [], []>} : vector<8x36xbf16>, vector<36x32xbf16>, vector<8x32xf32> -> vector<8x32xf32>
    %c0_3 = arith.constant 0 : index
    %c0_4 = arith.constant 0 : index
    %4 = vector.load %arg4[%c0_3, %c0_4] : memref<4x32xf32, #tpu.memory_space<vmem>>, vector<4x32xf32>
    %5 = vector.extract_strided_slice %4 {offsets = [0, 0], sizes = [1, 32], strides = [1, 1]} : vector<4x32xf32> to vector<1x32xf32>
    %6 = vector.broadcast %5 : vector<1x32xf32> to vector<8x32xf32>
    %7 = arith.addf %3, %6 : vector<8x32xf32>
    %cst_5 = arith.constant dense<0.000000e+00> : vector<8xf32>
    %8 = vector.multi_reduction <add>, %7, %cst_5 [1] : vector<8x32xf32> to vector<8xf32>
    %9 = vector.shape_cast %8 : vector<8xf32> to vector<8x1xf32>
    %cst_6 = arith.constant 3.200000e+01 : f32
    %10 = vector.broadcast %cst_6 : f32 to vector<8x1xf32>
    %11 = arith.divf %9, %10 : vector<8x1xf32>
    %12 = vector.broadcast %11 : vector<8x1xf32> to vector<8x32xf32>
    %13 = arith.subf %7, %12 : vector<8x32xf32>
    %14 = arith.mulf %13, %13 : vector<8x32xf32>
    %cst_7 = arith.constant dense<0.000000e+00> : vector<8xf32>
    %15 = vector.multi_reduction <add>, %14, %cst_7 [1] : vector<8x32xf32> to vector<8xf32>
    %16 = vector.shape_cast %15 : vector<8xf32> to vector<8x1xf32>
    %cst_8 = arith.constant 3.200000e+01 : f32
    %17 = vector.broadcast %cst_8 : f32 to vector<8x1xf32>
    %18 = arith.divf %16, %17 : vector<8x1xf32>
    %cst_9 = arith.constant 9.99999974E-6 : f32
    %19 = vector.broadcast %cst_9 : f32 to vector<8x1xf32>
    %20 = arith.addf %18, %19 : vector<8x1xf32>
    %21 = math.rsqrt %20 : vector<8x1xf32>
    %22 = vector.broadcast %21 : vector<8x1xf32> to vector<8x32xf32>
    %23 = arith.mulf %13, %22 : vector<8x32xf32>
    %24 = vector.extract_strided_slice %4 {offsets = [1, 0], sizes = [1, 32], strides = [1, 1]} : vector<4x32xf32> to vector<1x32xf32>
    %25 = vector.broadcast %24 : vector<1x32xf32> to vector<8x32xf32>
    %26 = arith.mulf %23, %25 : vector<8x32xf32>
    %27 = vector.extract_strided_slice %4 {offsets = [2, 0], sizes = [1, 32], strides = [1, 1]} : vector<4x32xf32> to vector<1x32xf32>
    %28 = vector.broadcast %27 : vector<1x32xf32> to vector<8x32xf32>
    %29 = arith.addf %26, %28 : vector<8x32xf32>
    %cst_10 = arith.constant 0.000000e+00 : f32
    %30 = vector.broadcast %cst_10 : f32 to vector<8x32xf32>
    %31 = arith.maximumf %29, %30 : vector<8x32xf32>
    %32 = arith.truncf %31 : vector<8x32xf32> to vector<8x32xbf16>
    %c0_11 = arith.constant 0 : index
    %c0_12 = arith.constant 0 : index
    %33 = vector.load %arg3[%c0_11, %c0_12] : memref<32x32xbf16, #tpu.memory_space<vmem>>, vector<32x32xbf16>
    %cst_13 = arith.constant dense<0.000000e+00> : vector<8x32xf32>
    %34 = tpu.matmul %32, %33, %cst_13 {dimension_numbers = #tpu.dot_dimension_numbers<[1], [0], [0], [1], [0, 0, 1, 1], [], []>} : vector<8x32xbf16>, vector<32x32xbf16>, vector<8x32xf32> -> vector<8x32xf32>
    %35 = vector.extract_strided_slice %4 {offsets = [3, 0], sizes = [1, 32], strides = [1, 1]} : vector<4x32xf32> to vector<1x32xf32>
    %36 = vector.broadcast %35 : vector<1x32xf32> to vector<8x32xf32>
    %37 = arith.addf %34, %36 : vector<8x32xf32>
    %c0_14 = arith.constant 0 : index
    %c0_15 = arith.constant 0 : index
    %38 = vector.load %arg5[%c0_14, %c0_15] : memref<8x32xf32, #tpu.memory_space<vmem>>, vector<8x32xf32>
    tpu.vector_store %arg5[%c0_14, %c0_15], %37 {strides = array<i32>} : memref<8x32xf32, #tpu.memory_space<vmem>>, vector<8x32xf32>,
    return
  }
  func.func @transform_0(%arg0: i32) -> (i32, i32) {
    %c0_i32 = arith.constant 0 : i32
    %c0_i32_0 = arith.constant 0 : i32
    return %arg0, %c0_i32 : i32, i32
  }
  func.func @transform_1(%arg0: i32) -> (i32, i32) {
    %c0_i32 = arith.constant 0 : i32
    %c0_i32_0 = arith.constant 0 : i32
    %c0_i32_1 = arith.constant 0 : i32
    return %c0_i32, %c0_i32_0 : i32, i32
  }
  func.func @transform_2(%arg0: i32) -> (i32, i32) {
    %c0_i32 = arith.constant 0 : i32
    %c0_i32_0 = arith.constant 0 : i32
    %c0_i32_1 = arith.constant 0 : i32
    return %c0_i32, %c0_i32_0 : i32, i32
  }
  func.func @transform_3(%arg0: i32) -> (i32, i32) {
    %c0_i32 = arith.constant 0 : i32
    %c0_i32_0 = arith.constant 0 : i32
    %c0_i32_1 = arith.constant 0 : i32
    return %c0_i32, %c0_i32_0 : i32, i32
  }
  func.func @transform_4(%arg0: i32) -> (i32, i32) {
    %c0_i32 = arith.constant 0 : i32
    %c0_i32_0 = arith.constant 0 : i32
    return %arg0, %c0_i32 : i32, i32
  }
}

</mosaic_0001>

<llo_original>
// kernel: tpu_custom_call.1
$region0: #{tpu_custom_call.1}
  #allocation0 [shape = 'u32[]', space=smem, size = 0x4, offset = 0x4, fixed_abs, tag = 'smem constant byte address 0x4 - core index']
  #allocation1 [shape = 'u32[72,128]{1,0:T(1,128)}', space=vmem, size = 0x9000, scoped, tag = 'internal scratch']
  %s0 = inlined_call_operand.vmem [shape: f32[8,36], index: 0, kind: input, shape index: {}]
  %s1 = inlined_call_operand.vmem [shape: bf16[36,32], index: 1, kind: input, shape index: {}]
  %s2 = inlined_call_operand.vmem [shape: bf16[32,32], index: 2, kind: input, shape index: {}]
  %s3 = inlined_call_operand.vmem [shape: f32[4,32], index: 3, kind: input, shape index: {}]
  %s4 = inlined_call_operand.hbm [shape: f32[8,32], index: 4, kind: output, shape index: {}]
  %s5 = sld [smem:[#allocation0]]
  $region26: #{tpu_custom_call.1} parent=0
    _
  %s7 = ssub.s32 1, %s5
  %s8 = scalar_select 0, %s7, %s5
  $region1: #{tpu_custom_call.1} parent=0
    #allocation2 [shape = 'u8[4096]{0}', space=vmem, size = 0x1000, scoped, tag = 'output window, operand 0, single buffered']
    #allocation3 [shape = 's32[1]{0}', space=sflag, size = 0x4, scoped, tag = 'scoped memory for tpu_custom_call.1']
    %9 = vsyncpa [#allocation3], 0
    // Predicated region
    $region2: #{tpu_custom_call.1} parent=1 // pred_check
      _
    $region3: #{tpu_custom_call.1} parent=1 // pred_check_branch
      %11 = sbr.rel (0) target = $region5
    $region4: #{tpu_custom_call.1} parent=1 // pred_region
      _
    $region5: #{tpu_custom_call.1} parent=1 // pred_fallthru
      _
    // Predicated region
    $region6: #{tpu_custom_call.1} parent=1 // pred_check
      _
    $region7: #{tpu_custom_call.1} parent=1 // pred_check_branch
      %13 = sbr.rel (0) target = $region9
    $region8: #{tpu_custom_call.1} parent=1 // pred_region
      _
    $region9: #{tpu_custom_call.1} parent=1 // pred_fallthru
      _
    // Predicated region
    $region10: #{tpu_custom_call.1} parent=1 // pred_check
      _
    $region11: #{tpu_custom_call.1} parent=1 // pred_check_branch
      %15 = sbr.rel (0) target = $region13
    $region12: #{tpu_custom_call.1} parent=1 // pred_region
      _
    $region13: #{tpu_custom_call.1} parent=1 // pred_fallthru
      _
    // Predicated region
    $region14: #{tpu_custom_call.1} parent=1 // pred_check
      _
    $region15: #{tpu_custom_call.1} parent=1 // pred_check_branch
      %17 = sbr.rel (0) target = $region17
    $region16: #{tpu_custom_call.1} parent=1 // pred_region
      _
    $region17: #{tpu_custom_call.1} parent=1 // pred_fallthru
      _
    %v19 = vld [vmem:[%s0] sm:$0xff]
    %v20 = vpack.c.bf16 %v19, %v19
    %v21 = vld [vmem:[%s1] sm:$0xf]
    %v22 = vld [vmem:[%s1 + $0x4] sm:$0xf]
    %v23 = vld [vmem:[%s1 + $0x8] sm:$0xf]
    %v24 = vld [vmem:[%s1 + $0xc] sm:$0xf]
    %v25 = vld [vmem:[%s1 + $0x10] sm:$0x3]
    %v26 = vld [vmem:[%s3] sm:$0xf]
    %v27 = vperm.slane %v26, 0
    %v33 = vunpack.c.l.b16 %v21
    %v34 = vunpack.c.l.b16 %v22
    %v35 = vunpack.c.l.b16 %v23
    %v36 = vunpack.c.l.b16 %v24
    %v37 = vunpack.c.l.b16 %v25
    %v38 = vpack.c.b16 %v34, %v33
    %v39 = vpack.c.b16 %v36, %v35
    %v40 = vpack.c.b16 %v37, %v37
    %vm43 = vcmask 293888
    %v45 = vsel %vm43, %v20, 0
    %vm47 = vcmask 1041408
    %v49 = vsel %vm47, %v40, 0
    %51 = vmatpush.bf16.msra.mxu0 0
    %52 = vmatpush.bf16.msra.mxu0 0
    %53 = vmatpush.bf16.msra.mxu0 0
    %54 = vmatpush.bf16.msra.mxu0 0
    %55 = vmatpush.bf16.msra.mxu0 0
    %56 = vmatpush.bf16.msra.mxu0 %v49
    %57 = vmatpush.bf16.msra.mxu0 %v39
    %58 = vmatpush.bf16.msra.mxu0 %v38
    %59 = vmatmul.bf16.gmra.mxu0 %v45
    %v60 = vpop.f32.mrf.mxu0
    %v61 = vadd.f32 %v27, %v60
    %v62 = vpop.f32.mrf.mxu0
    %63 = vdwg.mxu0
    %vm64 = vcmask 261120
    %v65 = vsel %vm64, %v61, 0.0
    %66 = vadd.xlane.f32.xlu0 %v65
    %v67 = vpop.xlane.xlu0 %66
    %v68 = vrcp.pop 32.0
    %v69 = vmul.f32 32.0, %v68
    %v70 = vsub.f32 1.0, %v69
    %v71 = vmul.f32 %v68, %v70
    %v72 = vadd.f32 %v68, %v71
    %vm73 = vweird.f32 %v68
    %v74 = vsel %vm73, %v68, %v72
    %v75 = vmul.f32 %v67, %v74
    %v76 = vsub.f32 %v61, %v75
    %v77 = vmul.f32 %v76, %v76
    %v78 = vsel %vm64, %v77, 0.0
    %79 = vadd.xlane.f32.xlu0 %v78
    %v80 = vpop.xlane.xlu0 %79
    %v81 = vmul.f32 %v80, %v74
    %v82 = vadd.f32 %v81, 1e-05
    %v83 = vrsqrt.pop %v82
    %v84 = vmul.f32 %v83, %v82
    %v85 = vmul.f32 %v84, %v83
    %v86 = vmul.f32 0.5, %v85
    %v87 = vsub.f32 1.5, %v86
    %v88 = vmul.f32 %v83, %v87
    %vm89 = vweird.f32 %v82
    %vm90 = vweird.f32 %v83
    %vm91 = vmor %vm89, %vm90
    %v92 = vsel %vm91, %v83, %v88
    %v93 = vmul.f32 %v76, %v92
    %v94 = vperm.slane %v26, 1
    %v95 = vmul.f32 %v93, %v94
    %v96 = vperm.slane %v26, 2
    %v97 = vadd.f32 %v95, %v96
    %v98 = vmax.f32 %v97, 0.0
    %v99 = vpack.c.bf16 %v98, %v98
    %v100 = vld [vmem:[%s2] sm:$0xf]
    %v101 = vld [vmem:[%s2 + $0x4] sm:$0xf]
    %v102 = vld [vmem:[%s2 + $0x8] sm:$0xf]
    %v103 = vld [vmem:[%s2 + $0xc] sm:$0xf]
    %v104 = vperm.slane %v26, 3
    %v109 = vunpack.c.l.b16 %v100
    %v110 = vunpack.c.l.b16 %v101
    %v111 = vunpack.c.l.b16 %v102
    %v112 = vunpack.c.l.b16 %v103
    %v113 = vpack.c.b16 %v110, %v109
    %v114 = vpack.c.b16 %v112, %v111
    %v118 = vsel %vm64, %v99, 0
    %120 = vmatpush.bf16.msra.mxu0 0
    %121 = vmatpush.bf16.msra.mxu0 0
    %122 = vmatpush.bf16.msra.mxu0 0
    %123 = vmatpush.bf16.msra.mxu0 0
    %124 = vmatpush.bf16.msra.mxu0 0
    %125 = vmatpush.bf16.msra.mxu0 0
    %126 = vmatpush.bf16.msra.mxu0 %v114
    %127 = vmatpush.bf16.msra.mxu0 %v113
    %128 = vmatmul.bf16.gmra.mxu0 %v118
    %v129 = vpop.f32.mrf.mxu0
    %v130 = vadd.f32 %v104, %v129
    %v131 = vpop.f32.mrf.mxu0
    %132 = vdwg.mxu0
    %133 = vst.msk [vmem:[#allocation2] sm:$0xff] %vm64, %v130
    // Predicated region
    $region18: #{tpu_custom_call.1} parent=1 // pred_check
      _
    $region19: #{tpu_custom_call.1} parent=1 // pred_check_branch
      %135 = sbr.rel (0) target = $region21
    $region20: #{tpu_custom_call.1} parent=1 // pred_region
      %137 = vsyncadd [#allocation3], 0
      %s139 = sshll.u32 [#allocation2], 4
      %s140 = int_to_ptr.vmem [resolvable:$true] %s139
      %s141 = sshll.u32 %s4, 4
      %s142 = int_to_ptr.hbm [resolvable:$true] %s141
      %144 = dma.vmem_to_hbm [thread:$0]  %s140, 128, %s142, [#allocation3]
    $region21: #{tpu_custom_call.1} parent=1 // pred_fallthru
      _
    // Predicated region
    $region22: #{tpu_custom_call.1} parent=1 // pred_check
      _
    $region23: #{tpu_custom_call.1} parent=1 // pred_check_branch
      %146 = sbr.rel (0) target = $region25
    $region24: #{tpu_custom_call.1} parent=1 // pred_region
      %148 = dma.done [#allocation3], 128
    $region25: #{tpu_custom_call.1} parent=1 // pred_fallthru
      _
    %149 = vsyncpa [#allocation3], 1

</llo_original>
